<compile_context>
chip_gen: v5e
topology: v5e:2x2
jax: 0.10.0
libtpu: 0.0.40
codegen_flags: <defaults>
</compile_context>

<pallas_src>
import jax
import jax.numpy as jnp
from jax.experimental import pallas as pl
from jax.experimental.pallas import tpu as pltpu


def sa3_kernel(w_ref, b_ref, x_ref, o_ref):
    # w_ref: SMEM (Cin,)  effective per-channel weights (mean over Cout of W)
    # b_ref: SMEM (1,)    effective bias (mean of conv bias)
    # x_ref: VMEM (Cin, ts)  spatial tile, channels on sublanes, pixels on lanes
    # o_ref: VMEM (1, ts)    lane-dense output tile
    cin = x_ref.shape[0]
    acc = x_ref[0:1, :].astype(jnp.float32) * w_ref[0]
    for c in range(1, cin):                       # tiny static unrolled loop (VPU)
        acc = acc + x_ref[c:c + 1, :].astype(jnp.float32) * w_ref[c]
    m = acc + b_ref[0]                            # == mean over Cout of (conv1x1)
    o_ref[...] = (jax.nn.sigmoid(m) + m).astype(o_ref.dtype)


def sa_module3_forward(x_nchw, w_conv, b_conv, *, tile_hw=2048):
    """x_nchw: (N, Cin, H, W). w_conv: (Cout, Cin, 1, 1). b_conv: (Cout,)."""
    N, Cin, H, W = x_nchw.shape
    Cout = w_conv.shape[0]
    HW = H * W

    # Fold 1x1-conv + channel-mean:  mean_o(x @ W^T + b) = x @ mean_o(W) + mean(b)
    w_eff = jnp.mean(w_conv.reshape(Cout, Cin).astype(jnp.float32), axis=0)  # (Cin,)
    b_eff = jnp.mean(b_conv.astype(jnp.float32)).reshape(1)                  # (1,)

    # Keep NCHW; spatial axis goes to lanes. Free reshape, no transpose.
    x3 = x_nchw.reshape(N, Cin, HW)

    # Lane-dense spatial tile (multiple of 128); pad HW so it divides evenly.
    hw128 = pl.cdiv(HW, 128) * 128
    ts = min(tile_hw, hw128)
    hw_pad = pl.cdiv(HW, ts) * ts
    if hw_pad != HW:
        x3 = jnp.pad(x3, ((0, 0), (0, 0), (0, hw_pad - HW)))

    grid = (N, hw_pad // ts)

    out = pl.pallas_call(
        sa3_kernel,
        out_shape=jax.ShapeDtypeStruct((N, 1, hw_pad), x_nchw.dtype),
        grid_spec=pltpu.PrefetchScalarGridSpec(
            num_scalar_prefetch=0,
            grid=grid,
            in_specs=[
                pl.BlockSpec(memory_space=pltpu.MemorySpace.SMEM),   # w_eff
                pl.BlockSpec(memory_space=pltpu.MemorySpace.SMEM),   # b_eff
                pl.BlockSpec((None, Cin, ts), lambda n, s: (n, 0, s)),
            ],
            out_specs=pl.BlockSpec((None, 1, ts), lambda n, s: (n, 0, s)),
        ),
        compiler_params=pltpu.CompilerParams(
            dimension_semantics=("parallel", "parallel")),
    )(w_eff, b_eff, x3)

    # Strip padding, restore (N, 1, H, W).
    return out[:, :, :HW].reshape(N, 1, H, W)


def sa_module3_reference(x_nchw, w_conv, b_conv):
    """Pure-JAX reference mirroring the PyTorch forward (unfused)."""
    N, Cin, H, W = x_nchw.shape
    Cout = w_conv.shape[0]
    x_rows = jnp.transpose(x_nchw, (0, 2, 3, 1)).reshape(N * H * W, Cin)
    y = x_rows @ jnp.transpose(w_conv.reshape(Cout, Cin), (1, 0)) + b_conv
    m = jnp.mean(y, axis=-1, keepdims=True)
    out = jax.nn.sigmoid(m) + m
    return jnp.transpose(out.reshape(N, H, W, 1), (0, 3, 1, 2))


if __name__ == "__main__":
    key = jax.random.PRNGKey(0)
    k_x, k_w, k_b = jax.random.split(key, 3)

    N, Cin, H, W = 2, 4, 16, 16
    Cout = Cin // 2  # in_planes // 2

    x = jax.random.normal(k_x, (N, Cin, H, W), dtype=jnp.float32)
    w_conv = jax.random.normal(k_w, (Cout, Cin, 1, 1), dtype=jnp.float32) * 0.1
    b_conv = jax.random.normal(k_b, (Cout,), dtype=jnp.float32) * 0.1

    out = sa_module3_forward(x, w_conv, b_conv)
    out = jax.block_until_ready(out)

    ref = sa_module3_reference(x, w_conv, b_conv)
    assert out.shape == (N, 1, H, W)
    assert jnp.allclose(out, ref, atol=1e-5, rtol=1e-5)

    print("KERNEL_OK")
</pallas_src>

<mosaic_0001>
module attributes {stable_mosaic.version = 11 : i64} {
  func.func @sa3_kernel(%arg0: i32, %arg1: i32, %arg2: memref<4xf32, #tpu.memory_space<smem>>, %arg3: memref<1xf32, #tpu.memory_space<smem>>, %arg4: memref<1x4x256xf32, #tpu.memory_space<vmem>>, %arg5: memref<1x1x256xf32, #tpu.memory_space<vmem>>) attributes {dimension_semantics = [#tpu.dimension_semantics<parallel>, #tpu.dimension_semantics<parallel>], iteration_bounds = array<i64: 2, 1>, scalar_prefetch = 0 : i64, scratch_operands = 0 : i64, tpu.core_type = #tpu.core_type<tc>, window_params = [{transform_indices = @transform_0, window_bounds = array<i64: 4>}, {transform_indices = @transform_1, window_bounds = array<i64: 1>}, {transform_indices = @transform_2, window_bounds = array<i64: 1, 4, 256>}, {transform_indices = @transform_3, window_bounds = array<i64: 1, 1, 256>}]} {
    %c0 = arith.constant 0 : index
    %c0_0 = arith.constant 0 : index
    %c0_1 = arith.constant 0 : index
    %0 = vector.load %arg4[%c0, %c0_0, %c0_1] : memref<1x4x256xf32, #tpu.memory_space<vmem>>, vector<1x1x256xf32>
    %1 = vector.shape_cast %0 : vector<1x1x256xf32> to vector<1x256xf32>
    %c0_2 = arith.constant 0 : index
    %2 = memref.load %arg2[%c0_2] : memref<4xf32, #tpu.memory_space<smem>>
    %3 = vector.broadcast %2 : f32 to vector<1x256xf32>
    %4 = arith.mulf %1, %3 : vector<1x256xf32>
    %c0_3 = arith.constant 0 : index
    %c1 = arith.constant 1 : index
    %c0_4 = arith.constant 0 : index
    %5 = vector.load %arg4[%c0_3, %c1, %c0_4] : memref<1x4x256xf32, #tpu.memory_space<vmem>>, vector<1x1x256xf32>
    %6 = vector.shape_cast %5 : vector<1x1x256xf32> to vector<1x256xf32>
    %c1_5 = arith.constant 1 : index
    %7 = memref.load %arg2[%c1_5] : memref<4xf32, #tpu.memory_space<smem>>
    %8 = vector.broadcast %7 : f32 to vector<1x256xf32>
    %9 = arith.mulf %6, %8 : vector<1x256xf32>
    %10 = arith.addf %4, %9 : vector<1x256xf32>
    %c0_6 = arith.constant 0 : index
    %c2 = arith.constant 2 : index
    %c0_7 = arith.constant 0 : index
    %11 = vector.load %arg4[%c0_6, %c2, %c0_7] : memref<1x4x256xf32, #tpu.memory_space<vmem>>, vector<1x1x256xf32>
    %12 = vector.shape_cast %11 : vector<1x1x256xf32> to vector<1x256xf32>
    %c2_8 = arith.constant 2 : index
    %13 = memref.load %arg2[%c2_8] : memref<4xf32, #tpu.memory_space<smem>>
    %14 = vector.broadcast %13 : f32 to vector<1x256xf32>
    %15 = arith.mulf %12, %14 : vector<1x256xf32>
    %16 = arith.addf %10, %15 : vector<1x256xf32>
    %c0_9 = arith.constant 0 : index
    %c3 = arith.constant 3 : index
    %c0_10 = arith.constant 0 : index
    %17 = vector.load %arg4[%c0_9, %c3, %c0_10] : memref<1x4x256xf32, #tpu.memory_space<vmem>>, vector<1x1x256xf32>
    %18 = vector.shape_cast %17 : vector<1x1x256xf32> to vector<1x256xf32>
    %c3_11 = arith.constant 3 : index
    %19 = memref.load %arg2[%c3_11] : memref<4xf32, #tpu.memory_space<smem>>
    %20 = vector.broadcast %19 : f32 to vector<1x256xf32>
    %21 = arith.mulf %18, %20 : vector<1x256xf32>
    %22 = arith.addf %16, %21 : vector<1x256xf32>
    %c0_12 = arith.constant 0 : index
    %23 = memref.load %arg3[%c0_12] : memref<1xf32, #tpu.memory_space<smem>>
    %24 = vector.broadcast %23 : f32 to vector<1x256xf32>
    %25 = arith.addf %22, %24 : vector<1x256xf32>
    %26 = arith.negf %25 : vector<1x256xf32>
    %27 = math.exp %26 : vector<1x256xf32>
    %cst = arith.constant 1.000000e+00 : f32
    %28 = vector.broadcast %cst : f32 to vector<1x256xf32>
    %29 = arith.addf %28, %27 : vector<1x256xf32>
    %30 = arith.divf %28, %29 : vector<1x256xf32>
    %31 = arith.addf %30, %25 : vector<1x256xf32>
    %c0_13 = arith.constant 0 : index
    %c0_14 = arith.constant 0 : index
    %c0_15 = arith.constant 0 : index
    %32 = vector.load %arg5[%c0_13, %c0_14, %c0_15] : memref<1x1x256xf32, #tpu.memory_space<vmem>>, vector<1x1x256xf32>
    %33 = vector.shape_cast %32 : vector<1x1x256xf32> to vector<1x256xf32>
    %34 = vector.shape_cast %31 : vector<1x256xf32> to vector<1x1x256xf32>
    tpu.vector_store %arg5[%c0_13, %c0_14, %c0_15], %34 {strides = array<i32>} : memref<1x1x256xf32, #tpu.memory_space<vmem>>, vector<1x1x256xf32>,
    return
  }
  func.func @transform_0(%arg0: i32, %arg1: i32) -> i32 {
    %c0_i32 = arith.constant 0 : i32
    %c0_i32_0 = arith.constant 0 : i32
    return %c0_i32 : i32
  }
  func.func @transform_1(%arg0: i32, %arg1: i32) -> i32 {
    %c0_i32 = arith.constant 0 : i32
    %c0_i32_0 = arith.constant 0 : i32
    return %c0_i32 : i32
  }
  func.func @transform_2(%arg0: i32, %arg1: i32) -> (i32, i32, i32) {
    %c0_i32 = arith.constant 0 : i32
    %c0_i32_0 = arith.constant 0 : i32
    return %arg0, %c0_i32, %arg1 : i32, i32, i32
  }
  func.func @transform_3(%arg0: i32, %arg1: i32) -> (i32, i32, i32) {
    %c0_i32 = arith.constant 0 : i32
    %c0_i32_0 = arith.constant 0 : i32
    return %arg0, %c0_i32, %arg1 : i32, i32, i32
  }
}

</mosaic_0001>

<llo_original>
// kernel: tpu_custom_call.1
$region0: #{tpu_custom_call.1}
  #allocation0 [shape = 'u32[]', space=smem, size = 0x4, offset = 0x4, fixed_abs, tag = 'smem constant byte address 0x4 - core index']
  #allocation1 [shape = 'u32[72,128]{1,0:T(1,128)}', space=vmem, size = 0x9000, scoped, tag = 'internal scratch']
  #allocation2 [shape = 'f32[1]{0:T(128)S(6)}', space=smem, size = 0x200, scoped, tag = 'scoped memory for tpu_custom_call.1']
  %s0 = inlined_call_operand.vmem [shape: f32[4], index: 0, kind: input, shape index: {}]
  %s1 = inlined_call_operand.<no memory space> [shape: f32[1], index: 1, kind: input, shape index: {}]
  %s2 = inlined_call_operand.hbm [shape: f32[2,4,256], index: 2, kind: input, shape index: {}]
  %s3 = inlined_call_operand.hbm [shape: f32[2,1,256], index: 3, kind: output, shape index: {}]
  %s4 = sld [smem:[#allocation0]]
  $region53: #{tpu_custom_call.1} parent=0
    _
  %s6 = ssub.s32 1, %s4
  %s7 = scalar_select 0, %s6, %s4
  %8 = sst [smem:[#allocation2]] %s1
  $region1: #{tpu_custom_call.1} parent=0
    #allocation3 [shape = 'u8[512]{0}', space=smem, size = 0x200, scoped, tag = 'input window, operand 0, single buffered']
    #allocation4 [shape = 's32[2]{0}', space=sflag, size = 0x8, scoped, tag = 'scoped memory for tpu_custom_call.1']
    #allocation5 [shape = 's32[2]{0}', space=sflag, size = 0x8, scoped, tag = 'scoped memory for tpu_custom_call.1']
    #allocation6 [shape = 's32[2]{0}', space=sflag, size = 0x8, scoped, tag = 'scoped memory for tpu_custom_call.1']
    #allocation7 [shape = 'u8[8192]{0}', space=vmem, size = 0x2000, scoped, tag = 'input window, operand 2']
    #allocation8 [shape = 'u8[2048]{0}', space=vmem, size = 0x800, scoped, tag = 'output window, operand 0']
    %9 = vsyncpa [#allocation6], 0
    %10 = vsyncpa [#allocation4], 0
    %s11 = scalar_lea.sflag [#allocation4], 1
    %12 = vsyncpa %s11, 0
    %13 = vsyncpa [#allocation5], 0
    %s14 = scalar_lea.sflag [#allocation5], 1
    %15 = vsyncpa %s14, 0
    loop: start=0, step=1, limit=4
    $region2: #{tpu_custom_call.1} parent=1 // loop_pre_header
      _
    $region3: #{tpu_custom_call.1} parent=1 // loop_header
      %s17 = sphi 0, %s21
      %p18 = scmp.ge.s32.totalorder %s17, 4
      %s24 = sphi 0, %s36
      %s25 = sphi 0, %s32
      %s26 = sphi 0, %s24
      %s27 = sphi 0, %s25
      %s28 = sphi 0, %s26
      %s29 = sphi 0, %s27
      %s37 = sphi 0, %s37
      %s39 = sphi 0, %s37
      %s40 = sphi 0, %s39
      %s54 = sphi 0, %s40
      %s58 = sphi 0, %s58
      %s60 = sphi 0, %s58
      %s61 = sphi 0, %s60
      %s75 = sphi 0, %s61
      %s83 = sphi 0, %s85
      %s86 = sphi 0, %s83
      %s87 = sphi 0, %s86
      %s103 = sphi 0, %s87
      %s111 = sphi 0, %s113
      %s114 = sphi 0, %s111
      %s115 = sphi 0, %s114
      %s131 = sphi 0, %s115
    $region4: #{tpu_custom_call.1} parent=1 // loop_header_branch
      %20 = sbr.rel (%p18) target = $region8
    $region5: #{tpu_custom_call.1} parent=1 // loop_body
      %s22 = ssub.s32 %s17, 1
      %s23 = ssub.s32 %s17, 2
      %s30 = sadd.s32 1, %s25
      %p31 = scmp.ge.s32.totalorder %s30, 1
      %s32 = scalar_select %p31, 0, %s30
      %s33 = sadd.s32 1, %s24
      %s34 = scalar_select %p31, %s33, %s24
      %p35 = scmp.ge.s32.totalorder %s34, 2
      %s36 = scalar_select %p35, 0, %s34
      %s38 = sadd.s32 %s37, 1
      %p41 = scmp.eq.s32.totalorder %s17, 1
      %p42 = scmp.ne.s32.totalorder %s37, %s39
      %p43 = scmp.eq.s32.totalorder %s17, 0
      %p44 = por %p42, %p43
      %p45 = scmp.ne.s32.totalorder %s37, %s39
      %p46 = scmp.eq.s32.totalorder %s22, 1
      %p47 = por %p45, %p46
      %p48 = scmp.ne.s32.totalorder %s39, %s40
      %p49 = scmp.eq.s32.totalorder %s22, 0
      %p50 = por %p48, %p49
      %p51 = scmp.ne.s32.totalorder %s39, %s40
      %p52 = scmp.eq.s32.totalorder %s23, 1
      %p53 = por %p51, %p52
      %p55 = scmp.ne.s32.totalorder %s40, %s54
      %p56 = scmp.eq.s32.totalorder %s23, 0
      %p57 = por %p55, %p56
      %s59 = sadd.s32 %s58, 1
      %p62 = scmp.eq.s32.totalorder %s17, 1
      %p63 = scmp.ne.s32.totalorder %s58, %s60
      %p64 = scmp.eq.s32.totalorder %s17, 0
      %p65 = por %p63, %p64
      %p66 = scmp.ne.s32.totalorder %s58, %s60
      %p67 = scmp.eq.s32.totalorder %s22, 1
      %p68 = por %p66, %p67
      %p69 = scmp.ne.s32.totalorder %s60, %s61
      %p70 = scmp.eq.s32.totalorder %s22, 0
      %p71 = por %p69, %p70
      %p72 = scmp.ne.s32.totalorder %s60, %s61
      %p73 = scmp.eq.s32.totalorder %s23, 1
      %p74 = por %p72, %p73
      %p76 = scmp.ne.s32.totalorder %s61, %s75
      %p77 = scmp.eq.s32.totalorder %s23, 0
      %p78 = por %p76, %p77
      %s79 = ssub.s32 %s24, %s36
      %s80 = ssub.s32 %s25, %s32
      %s81 = sor.u32 %s79, %s80
      %p82 = scmp.eq.s32.totalorder %s81, 0
      %s84 = sadd.s32 %s83, 1
      %s85 = scalar_select %p82, %s83, %s84
      %p88 = pneg %p82
      %p89 = scmp.eq.s32.totalorder %s17, 1
      %p90 = por %p88, %p89
      %p91 = scmp.ne.s32.totalorder %s83, %s86
      %p92 = scmp.eq.s32.totalorder %s17, 0
      %p93 = por %p91, %p92
      %p94 = scmp.ne.s32.totalorder %s83, %s86
      %p95 = scmp.eq.s32.totalorder %s22, 1
      %p96 = por %p94, %p95
      %p97 = scmp.ne.s32.totalorder %s86, %s87
      %p98 = scmp.eq.s32.totalorder %s22, 0
      %p99 = por %p97, %p98
      %p100 = scmp.ne.s32.totalorder %s86, %s87
      %p101 = scmp.eq.s32.totalorder %s23, 1
      %p102 = por %p100, %p101
      %p104 = scmp.ne.s32.totalorder %s87, %s103
      %p105 = scmp.eq.s32.totalorder %s23, 0
      %p106 = por %p104, %p105
      %s107 = ssub.s32 %s24, %s36
      %s108 = ssub.s32 %s25, %s32
      %s109 = sor.u32 %s107, %s108
      %p110 = scmp.eq.s32.totalorder %s109, 0
      %s112 = sadd.s32 %s111, 1
      %s113 = scalar_select %p110, %s111, %s112
      %p116 = pneg %p110
      %p117 = scmp.eq.s32.totalorder %s17, 1
      %p118 = por %p116, %p117
      %p119 = scmp.ne.s32.totalorder %s111, %s114
      %p120 = scmp.eq.s32.totalorder %s17, 0
      %p121 = por %p119, %p120
      %p122 = scmp.ne.s32.totalorder %s111, %s114
      %p123 = scmp.eq.s32.totalorder %s22, 1
      %p124 = por %p122, %p123
      %p125 = scmp.ne.s32.totalorder %s114, %s115
      %p126 = scmp.eq.s32.totalorder %s22, 0
      %p127 = por %p125, %p126
      %p128 = scmp.ne.s32.totalorder %s114, %s115
      %p129 = scmp.eq.s32.totalorder %s23, 1
      %p130 = por %p128, %p129
      %p132 = scmp.ne.s32.totalorder %s115, %s131
      %p133 = scmp.eq.s32.totalorder %s23, 0
      %p134 = por %p132, %p133
      %p135 = scmp.le.s32.totalorder 1, %s17
      %p136 = scmp.lt.s32.totalorder %s17, 3
      %p137 = pnand %p135, %p136
      %p138 = pneg %p137
      // Predicated region
      $region9: #{tpu_custom_call.1} parent=5 // pred_check
        _
      $region10: #{tpu_custom_call.1} parent=5 // pred_check_branch
        %140 = sbr.rel (%p137) target = $region12
      $region11: #{tpu_custom_call.1} parent=5 // pred_region
        %s141 = ssub.s32 %s17, 1
        // Predicated region
        $region13: #{tpu_custom_call.1} parent=11 // pred_check
          %p142 = pneg %p50
        $region14: #{tpu_custom_call.1} parent=11 // pred_check_branch
          %144 = sbr.rel (%p142) target = $region16
        $region15: #{tpu_custom_call.1} parent=11 // pred_region
          %146 = vsyncadd [#allocation6], 0
          %s148 = sshll.u32 %s0, 4
          %s149 = int_to_ptr.vmem [resolvable:$true] %s148
          %151 = dma.vmem_to_smem %s149, 16, [#allocation3], [#allocation6]
        $region16: #{tpu_custom_call.1} parent=11 // pred_fallthru
          _
        // Predicated region
        $region17: #{tpu_custom_call.1} parent=11 // pred_check
          %p152 = pneg %p71
        $region18: #{tpu_custom_call.1} parent=11 // pred_check_branch
          %154 = sbr.rel (%p152) target = $region20
        $region19: #{tpu_custom_call.1} parent=11 // pred_region
          _
        $region20: #{tpu_custom_call.1} parent=11 // pred_fallthru
          _
      $region12: #{tpu_custom_call.1} parent=5 // pred_fallthru
        _
      %p155 = scmp.lt.s32.totalorder %s17, 2
      // Predicated region
      $region21: #{tpu_custom_call.1} parent=5 // pred_check
        %p156 = pneg %p155
      $region22: #{tpu_custom_call.1} parent=5 // pred_check_branch
        %158 = sbr.rel (%p156) target = $region24
      $region23: #{tpu_custom_call.1} parent=5 // pred_region
        // Predicated region
        $region25: #{tpu_custom_call.1} parent=23 // pred_check
          %p159 = pneg %p93
        $region26: #{tpu_custom_call.1} parent=23 // pred_check_branch
          %161 = sbr.rel (%p159) target = $region28
        $region27: #{tpu_custom_call.1} parent=23 // pred_region
          %s162 = sand.u32 %s83, 1
          %s163 = scalar_lea.sflag [#allocation4], %s162
          %s164 = sand.u32 %s83, 1
          %s165 = smul.addr %s164, 8
          %s166 = scalar_lea.vmem [#allocation7], %s165
          %s167 = smul.u32 2, %s25
          %169 = vsyncadd %s163, 0
          %s170 = smul.addr %s24, 2
          %s171 = sadd.s32 %s167, %s170
          %s172 = smul.addr %s171, 4
          %s173 = scalar_lea.hbm %s2, %s172
          %s175 = sshll.u32 %s173, 4
          %s176 = int_to_ptr.hbm [resolvable:$true] %s175
          %s177 = sshll.u32 %s166, 4
          %s178 = int_to_ptr.vmem [resolvable:$true] %s177
          %180 = dma.hbm_to_vmem [thread:$0]  %s176, 128, %s178, %s163
        $region28: #{tpu_custom_call.1} parent=23 // pred_fallthru
          _
      $region24: #{tpu_custom_call.1} parent=5 // pred_fallthru
        _
      %p181 = scmp.le.s32.totalorder 1, %s17
      %p182 = scmp.lt.s32.totalorder %s17, 3
      %p183 = pnand %p181, %p182
      %p184 = pneg %p183
      // Predicated region
      $region29: #{tpu_custom_call.1} parent=5 // pred_check
        _
      $region30: #{tpu_custom_call.1} parent=5 // pred_check_branch
        %186 = sbr.rel (%p183) target = $region32
      $region31: #{tpu_custom_call.1} parent=5 // pred_region
        %s187 = ssub.s32 %s17, 1
        // Predicated region
        $region33: #{tpu_custom_call.1} parent=31 // pred_check
          %p188 = pneg %p50
        $region34: #{tpu_custom_call.1} parent=31 // pred_check_branch
          %190 = sbr.rel (%p188) target = $region36
        $region35: #{tpu_custom_call.1} parent=31 // pred_region
          %192 = dma.done [#allocation6], 16
        $region36: #{tpu_custom_call.1} parent=31 // pred_fallthru
          _
        %s193 = sand.u32 %s86, 1
        %s194 = scalar_lea.sflag [#allocation4], %s193
        %s195 = sand.u32 %s86, 1
        %s196 = smul.addr %s195, 8
        %s197 = scalar_lea.vmem [#allocation7], %s196
        // Predicated region
        $region37: #{tpu_custom_call.1} parent=31 // pred_check
          %p198 = pneg %p99
        $region38: #{tpu_custom_call.1} parent=31 // pred_check_branch
          %200 = sbr.rel (%p198) target = $region40
        $region39: #{tpu_custom_call.1} parent=31 // pred_region
          %202 = dma.done %s194, 128
        $region40: #{tpu_custom_call.1} parent=31 // pred_fallthru
          _
        %203 = sfence
        %p204 = pneg %p50
        %p205 = pneg %p47
        %p206 = pneg %p71
        %p207 = pneg %p68
        %s208 = sand.u32 %s86, 1
        %s209 = scalar_lea.sflag [#allocation4], %s208
        %s210 = sand.u32 %s86, 1
        %s211 = smul.addr %s210, 8
        %s212 = scalar_lea.vmem [#allocation7], %s211
        %p213 = pneg %p99
        %p214 = pneg %p96
        %p215 = pneg %p127
        %p216 = pneg %p124
        %s217 = sand.u32 %s114, 1
        %s218 = scalar_lea.sflag [#allocation5], %s217
        %s219 = sand.u32 %s114, 1
        %s220 = smul.addr %s219, 2
        %s221 = scalar_lea.vmem [#allocation8], %s220
        %s222 = smul.u32 2, %s27
        %s223 = smul.u32 2, %s27
        %v224 = vld [vmem:[%s197] ss:$4 sm:$0x3]
        %s225 = sld [smem:[#allocation3]]
        %v226 = vstv %s225
        %v227 = vmul.f32 %v224, %v226
        %s228 = scalar_lea.vmem %s197, 1 [#allocation7]
        %v229 = vld [vmem:[%s228] ss:$4 sm:$0x3]
        %s230 = sld [smem:[#allocation3 + $0x1]]
        %v231 = vstv %s230
        %v232 = vmul.f32 %v229, %v231
        %v233 = vadd.f32 %v227, %v232
        %s234 = scalar_lea.vmem %s197, 2 [#allocation7]
        %v235 = vld [vmem:[%s234] ss:$4 sm:$0x3]
        %s236 = sld [smem:[#allocation3 + $0x2]]
        %v237 = vstv %s236
        %v238 = vmul.f32 %v235, %v237
        %v239 = vadd.f32 %v233, %v238
        %s240 = scalar_lea.vmem %s197, 3 [#allocation7]
        %v241 = vld [vmem:[%s240] ss:$4 sm:$0x3]
        %s242 = sld [smem:[#allocation3 + $0x3]]
        %v243 = vstv %s242
        %v244 = vmul.f32 %v241, %v243
        %v245 = vadd.f32 %v239, %v244
        %s246 = sld [smem:[#allocation2]]
        %v247 = vstv %s246
        %v248 = vadd.f32 %v245, %v247
        %v249 = vxor.u32 %v248, 2147483648
        %v250 = vmul.f32 %v249, 1.442695
        %v251 = vpow.pop %v250
        %v252 = vadd.f32 %v251, 1.0
        %v253 = vrcp.pop %v252
        %v254 = vmul.f32 %v252, %v253
        %v255 = vsub.f32 1.0, %v254
        %v256 = vmul.f32 %v253, %v255
        %v257 = vadd.f32 %v253, %v256
        %vm258 = vweird.f32 %v252
        %vm259 = vweird.f32 %v253
        %vm260 = vmor %vm258, %vm259
        %v261 = vsel %vm260, %v253, %v257
        %v262 = vand.u32 2147483647, %v252
        %vm263 = vcmp.eq.f32.partialorder %v262, 8.507059e+37
        %v264 = vand.u32 %v252, 2147483648
        %v265 = vor.u32 1.1754944e-38, %v264
        %v266 = vsel %vm263, %v265, %v261
        %v267 = vmul.f32 1.0, %v266
        %v268 = vadd.f32 %v267, %v248
        %v269 = vlaneseq
        %vm270 = vcmp.ge.s32.totalorder %v269, 0
        %vm271 = vcmp.lt.s32.totalorder %v269, 256
        %vm272 = vmand %vm270, %vm271
        %273 = vst.msk [vmem:[%s221] sm:$0x3] %vm272, %v268
        %s274 = sand.u32 %s114, 1
        %s275 = scalar_lea.sflag [#allocation5], %s274
        %s276 = sand.u32 %s114, 1
        %s277 = smul.addr %s276, 2
        %s278 = scalar_lea.vmem [#allocation8], %s277
        // Predicated region
        $region41: #{tpu_custom_call.1} parent=31 // pred_check
          %p279 = pneg %p124
        $region42: #{tpu_custom_call.1} parent=31 // pred_check_branch
          %281 = sbr.rel (%p279) target = $region44
        $region43: #{tpu_custom_call.1} parent=31 // pred_region
          %s282 = smul.u32 2, %s27
          %284 = vsyncadd %s275, 0
          %s285 = smul.addr %s26, 2
          %s286 = sadd.s32 %s282, %s285
          %s287 = scalar_lea.hbm %s3, %s286
          %s289 = sshll.u32 %s278, 4
          %s290 = int_to_ptr.vmem [resolvable:$true] %s289
          %s291 = sshll.u32 %s287, 4
          %s292 = int_to_ptr.hbm [resolvable:$true] %s291
          %294 = dma.vmem_to_hbm [thread:$0]  %s290, 32, %s292, %s275
        $region44: #{tpu_custom_call.1} parent=31 // pred_fallthru
          _
      $region32: #{tpu_custom_call.1} parent=5 // pred_fallthru
        _
      %p295 = scmp.le.s32.totalorder 2, %s17
      // Predicated region
      $region45: #{tpu_custom_call.1} parent=5 // pred_check
        %p296 = pneg %p295
      $region46: #{tpu_custom_call.1} parent=5 // pred_check_branch
        %298 = sbr.rel (%p296) target = $region48
      $region47: #{tpu_custom_call.1} parent=5 // pred_region
        %s299 = ssub.s32 %s17, 2
        // Predicated region
        $region49: #{tpu_custom_call.1} parent=47 // pred_check
          %p300 = pneg %p130
        $region50: #{tpu_custom_call.1} parent=47 // pred_check_branch
          %302 = sbr.rel (%p300) target = $region52
        $region51: #{tpu_custom_call.1} parent=47 // pred_region
          %s303 = sand.u32 %s115, 1
          %s304 = scalar_lea.sflag [#allocation5], %s303
          %s305 = sand.u32 %s115, 1
          %s306 = smul.addr %s305, 2
          %s307 = scalar_lea.vmem [#allocation8], %s306
          %309 = dma.done %s304, 32
        $region52: #{tpu_custom_call.1} parent=47 // pred_fallthru
          _
      $region48: #{tpu_custom_call.1} parent=5 // pred_fallthru
        _
    $region6: #{tpu_custom_call.1} parent=1 // loop_footer
      %s21 = sadd.s32 1, %s17
    $region7: #{tpu_custom_call.1} parent=1 // loop_footer_branch
      %16 = sbr.rel target = $region3
    $region8: #{tpu_custom_call.1} parent=1 // loop_exit
      _
    %310 = vsyncpa [#allocation4], 1
    %s311 = scalar_lea.sflag [#allocation4], 1
    %312 = vsyncpa %s311, 1
    %313 = vsyncpa [#allocation5], 1
    %s314 = scalar_lea.sflag [#allocation5], 1
    %315 = vsyncpa %s314, 1
    %316 = vsyncpa [#allocation6], 1
    %s317 = scalar_lea.sflag [#allocation6], 1
    %318 = vsyncpa %s317, 1

</llo_original>
